<compile_context>
chip_gen: v7x
topology: tpu7x:2x2x1
jax: 0.10.0
libtpu: 0.0.40
codegen_flags: <defaults>
</compile_context>

<pallas_src>
import math

import jax
import jax.numpy as jnp
from jax.experimental import pallas as pl
from jax.experimental.pallas import tpu as pltpu


def _round_up(a, b):
    return (a + b - 1) // b * b


def _make_trihard_kernel(margin, n_real, bm, bn):
    """All closed-over values are plain Python numbers (no traced constants)."""
    margin = float(margin)
    eps = 1e-12

    def kernel(t_col_ref, t_row_ref, sq_col_ref, sq_row_ref, xr_ref, xc_ref,
               out_ref, pos_acc, neg_acc):
        i = pl.program_id(0)
        j = pl.program_id(1)

        @pl.when(j == 0)
        def _init():
            pos_acc[...] = jnp.full((bm, 1), -jnp.inf, dtype=jnp.float32)
            neg_acc[...] = jnp.full((bm, 1), jnp.inf, dtype=jnp.float32)

        # Gram slice on the MXU: contract the feature dim of BOTH operands
        # (same pattern as q @ k^T in flash attention -> no per-tile transpose),
        # f32 accumulation, inputs stay in their native dtype.
        g = jax.lax.dot_general(
            xr_ref[...], xc_ref[...],
            dimension_numbers=(((1,), (1,)), ((), ())),
            preferred_element_type=jnp.float32)                    # (bm, bn)

        # r_ij = ||x_j||^2 - 2 x_i.x_j ; adding ||x_i||^2, clamping and sqrt
        # are monotone, so hard mining can run directly on r.
        r = sq_row_ref[...] - 2.0 * g                              # (bm, bn)

        same = t_col_ref[...] == t_row_ref[...]                    # (bm, bn)
        col_valid = (j * bn + jax.lax.broadcasted_iota(
            jnp.int32, (1, bn), 1)) < n_real                       # (1, bn)
        pos_mask = jnp.logical_and(same, col_valid)
        neg_mask = jnp.logical_and(jnp.logical_not(same), col_valid)

        pos_acc[...] = jnp.maximum(
            pos_acc[...],
            jnp.max(jnp.where(pos_mask, r, -jnp.inf), axis=1, keepdims=True))
        neg_acc[...] = jnp.minimum(
            neg_acc[...],
            jnp.min(jnp.where(neg_mask, r, jnp.inf), axis=1, keepdims=True))

        @pl.when(j == pl.num_programs(1) - 1)
        def _finalize():
            sq_r = sq_col_ref[...]                                 # (bm, 1)
            # sqrt/clamp only on the 2*bm winners.
            dist_ap = jnp.sqrt(jnp.maximum(sq_r + pos_acc[...], eps))
            dist_an = jnp.sqrt(jnp.maximum(sq_r + neg_acc[...], eps))
            # MarginRankingLoss(dist_an, dist_ap, y=1): max(0, ap - an + m)
            hinge = jnp.maximum(dist_ap - dist_an + margin, 0.0)   # (bm, 1)
            row_idx = i * bm + jax.lax.broadcasted_iota(jnp.int32, (bm, 1), 0)
            hinge = jnp.where(row_idx < n_real, hinge, 0.0)
            # Lane-dense store: (bm, 1) -> (1, 1, bm).
            out_ref[...] = jnp.transpose(hinge).reshape(1, 1, bm)

    return kernel


def trihard_loss(inputs, targets, margin=0.3, block_rows=256, block_cols=512):
    """Batch-hard triplet loss. inputs: (n, d) float; targets: (n,) int labels."""
    n, d = inputs.shape
    bm = min(_round_up(block_rows, 8), _round_up(n, 8))
    d_pad = _round_up(d, 128)

    if _round_up(n, bm) <= block_cols:
        # Single column block (full-extent block along n).
        n_pad = _round_up(n, bm)
        bn = n_pad
    else:
        # Column-tiled online hard mining; bn must be lane-dense (x128).
        bn = _round_up(min(block_cols, _round_up(n, bm)), 128)
        n_pad = _round_up(n, math.lcm(bm, bn))

    num_row_blocks = n_pad // bm
    num_col_blocks = n_pad // bn

    # Zero padding changes neither norms nor dot products; padded labels are -1
    # and padded columns are additionally masked via col_valid in the kernel.
    x = jnp.pad(inputs, ((0, n_pad - n), (0, d_pad - d)))
    t = jnp.pad(targets.astype(jnp.int32), (0, n_pad - n), constant_values=-1)
    t_col = t.reshape(n_pad, 1)
    t_row = t.reshape(1, n_pad)

    # Column squared norms computed ONCE (single XLA pass), streamed in as both
    # an anchor column (bm,1) and a column row (1,bn).
    sq = jnp.sum(jnp.square(x.astype(jnp.float32)), axis=1)
    sq_col = sq.reshape(n_pad, 1)
    sq_row = sq.reshape(1, n_pad)

    itemsize = jnp.dtype(x.dtype).itemsize

    # VMEM sizing from the real block footprint (double-buffered x tiles plus
    # the (bm, bn) f32 intermediates), with headroom, capped at v7x physical.
    block_bytes = (
        2 * (bm + bn) * d_pad * itemsize       # xr / xc tiles, double-buffered
        + 8 * bm * bn * 4                      # g, r, masks, wheres
        + 4 * (bm + bn) * 8                    # labels + norms tiles
        + 8 * bm * 4)                          # output tile + accumulators
    vmem_limit = int(min(64 * 1024 * 1024, max(32 * 1024 * 1024, 2 * block_bytes)))

    cost = pl.CostEstimate(
        flops=2 * n_pad * n_pad * d_pad,
        transcendentals=2 * n_pad,
        bytes_accessed=(num_row_blocks * n_pad * d_pad * itemsize  # xc re-streamed per row block
                        + n_pad * d_pad * itemsize                 # xr read once
                        + num_row_blocks * n_pad * 8               # label/norm rows re-streamed
                        + n_pad * 12),                             # t_col, sq_col, output
    )

    per_anchor = pl.pallas_call(
        _make_trihard_kernel(float(margin), n, bm, bn),
        out_shape=jax.ShapeDtypeStruct((num_row_blocks, 1, bm), jnp.float32),
        grid=(num_row_blocks, num_col_blocks),
        in_specs=[
            pl.BlockSpec((bm, 1), lambda i, j: (i, 0)),        # anchor labels
            pl.BlockSpec((1, bn), lambda i, j: (0, j)),        # column labels
            pl.BlockSpec((bm, 1), lambda i, j: (i, 0)),        # anchor sq-norms
            pl.BlockSpec((1, bn), lambda i, j: (0, j)),        # column sq-norms
            pl.BlockSpec((bm, d_pad), lambda i, j: (i, 0)),    # anchor rows of x
            pl.BlockSpec((bn, d_pad), lambda i, j: (j, 0)),    # column rows of x
        ],
        out_specs=pl.BlockSpec((1, 1, bm), lambda i, j: (i, 0, 0)),
        scratch_shapes=[
            pltpu.VMEM((bm, 1), jnp.float32),   # running max of r over positives
            pltpu.VMEM((bm, 1), jnp.float32),   # running min of r over negatives
        ],
        compiler_params=pltpu.CompilerParams(
            dimension_semantics=("parallel", "arbitrary"),
            vmem_limit_bytes=vmem_limit),
        cost_estimate=cost,
    )(t_col, t_row, sq_col, sq_row, x, x)

    return jnp.sum(per_anchor) / jnp.float32(n)


def _reference(inputs, targets, margin=0.3):
    # Pure-JAX reference matching the PyTorch module.
    x = inputs.astype(jnp.float32)
    sq = jnp.sum(x * x, axis=1, keepdims=True)
    dist = sq + sq.T - 2.0 * (x @ x.T)
    dist = jnp.sqrt(jnp.maximum(dist, 1e-12))
    mask = targets[:, None] == targets[None, :]
    dist_ap = jnp.max(jnp.where(mask, dist, -jnp.inf), axis=1)
    dist_an = jnp.min(jnp.where(mask, jnp.inf, dist), axis=1)
    return jnp.mean(jnp.maximum(dist_ap - dist_an + margin, 0.0))


if __name__ == "__main__":
    key = jax.random.PRNGKey(0)
    k1, k2, k3, k4 = jax.random.split(key, 4)

    # Case 1: nominal small shape (n=8 anchors, 32-dim features), single block.
    n, d = 8, 32
    inputs = jax.random.normal(k1, (n, d), dtype=jnp.float32)
    targets = jnp.array([0, 0, 1, 1, 2, 2, 3, 3], dtype=jnp.int32)
    loss = jax.block_until_ready(trihard_loss(inputs, targets, margin=0.3))
    ref = _reference(inputs, targets, margin=0.3)
    assert jnp.allclose(loss, ref, atol=1e-4, rtol=1e-4), (loss, ref)

    # Case 2: ragged n + multi-row-block grid (exercises padding / row masking).
    n2, d2 = 13, 40
    inputs2 = jax.random.normal(k2, (n2, d2), dtype=jnp.float32)
    targets2 = jnp.array([0, 0, 0, 1, 1, 2, 2, 2, 3, 3, 4, 4, 1], dtype=jnp.int32)
    loss2 = jax.block_until_ready(
        trihard_loss(inputs2, targets2, margin=0.3, block_rows=8))
    ref2 = _reference(inputs2, targets2, margin=0.3)
    assert jnp.allclose(loss2, ref2, atol=1e-4, rtol=1e-4), (loss2, ref2)

    # Case 3: multi-column-block grid (online max/min accumulation across
    # column tiles) plus ragged padding on both axes.
    n3, d3 = 200, 48
    inputs3 = jax.random.normal(k3, (n3, d3), dtype=jnp.float32)
    targets3 = jax.random.randint(k4, (n3,), 0, 10, dtype=jnp.int32)
    loss3 = jax.block_until_ready(
        trihard_loss(inputs3, targets3, margin=0.3, block_rows=64, block_cols=128))
    ref3 = _reference(inputs3, targets3, margin=0.3)
    assert jnp.allclose(loss3, ref3, atol=1e-4, rtol=1e-4), (loss3, ref3)

    print("KERNEL_OK")
</pallas_src>

<mosaic_0001>
module attributes {stable_mosaic.version = 11 : i64} {
  func.func @kernel(%arg0: i32, %arg1: i32, %arg2: memref<8x1xi32, #tpu.memory_space<vmem>>, %arg3: memref<1x8xi32, #tpu.memory_space<vmem>>, %arg4: memref<8x1xf32, #tpu.memory_space<vmem>>, %arg5: memref<1x8xf32, #tpu.memory_space<vmem>>, %arg6: memref<8x128xf32, #tpu.memory_space<vmem>>, %arg7: memref<8x128xf32, #tpu.memory_space<vmem>>, %arg8: memref<1x1x8xf32, #tpu.memory_space<vmem>>, %arg9: memref<8x1xf32, #tpu.memory_space<vmem>>, %arg10: memref<8x1xf32, #tpu.memory_space<vmem>>) attributes {dimension_semantics = [#tpu.dimension_semantics<parallel>, #tpu.dimension_semantics<arbitrary>], iteration_bounds = array<i64: 1, 1>, scalar_prefetch = 0 : i64, scratch_operands = 2 : i64, tpu.core_type = #tpu.core_type<tc>, window_params = [{transform_indices = @transform_0, window_bounds = array<i64: 8, 1>}, {transform_indices = @transform_1, window_bounds = array<i64: 1, 8>}, {transform_indices = @transform_2, window_bounds = array<i64: 8, 1>}, {transform_indices = @transform_3, window_bounds = array<i64: 1, 8>}, {transform_indices = @transform_4, window_bounds = array<i64: 8, 128>}, {transform_indices = @transform_5, window_bounds = array<i64: 8, 128>}, {transform_indices = @transform_6, window_bounds = array<i64: 1, 1, 8>}]} {
    %c0_i32 = arith.constant 0 : i32
    %0 = arith.cmpi eq, %arg1, %c0_i32 : i32
    %1 = arith.extui %0 : i1 to i32
    %c0_i32_0 = arith.constant 0 : i32
    %2 = arith.cmpi ne, %1, %c0_i32_0 : i32
    scf.if %2 {
      %cst_27 = arith.constant 0xFF800000 : f32
      %44 = vector.broadcast %cst_27 : f32 to vector<8x1xf32>
      %c0_28 = arith.constant 0 : index
      %c0_29 = arith.constant 0 : index
      %45 = vector.load %arg9[%c0_28, %c0_29] : memref<8x1xf32, #tpu.memory_space<vmem>>, vector<8x1xf32>
      tpu.vector_store %arg9[%c0_28, %c0_29], %44 {strides = array<i32>} : memref<8x1xf32, #tpu.memory_space<vmem>>, vector<8x1xf32>,
      %cst_30 = arith.constant 0x7F800000 : f32
      %46 = vector.broadcast %cst_30 : f32 to vector<8x1xf32>
      %c0_31 = arith.constant 0 : index
      %c0_32 = arith.constant 0 : index
      %47 = vector.load %arg10[%c0_31, %c0_32] : memref<8x1xf32, #tpu.memory_space<vmem>>, vector<8x1xf32>
      tpu.vector_store %arg10[%c0_31, %c0_32], %46 {strides = array<i32>} : memref<8x1xf32, #tpu.memory_space<vmem>>, vector<8x1xf32>,
    } else {
    }
    %c0 = arith.constant 0 : index
    %c0_1 = arith.constant 0 : index
    %3 = vector.load %arg6[%c0, %c0_1] : memref<8x128xf32, #tpu.memory_space<vmem>>, vector<8x128xf32>
    %c0_2 = arith.constant 0 : index
    %c0_3 = arith.constant 0 : index
    %4 = vector.load %arg7[%c0_2, %c0_3] : memref<8x128xf32, #tpu.memory_space<vmem>>, vector<8x128xf32>
    %cst = arith.constant dense<0.000000e+00> : vector<8x8xf32>
    %5 = tpu.matmul %3, %4, %cst {dimension_numbers = #tpu.dot_dimension_numbers<[1], [1], [0], [0], [0, 0, 1, 0], [], []>} : vector<8x128xf32>, vector<8x128xf32>, vector<8x8xf32> -> vector<8x8xf32>
    %c0_4 = arith.constant 0 : index
    %c0_5 = arith.constant 0 : index
    %6 = vector.load %arg5[%c0_4, %c0_5] : memref<1x8xf32, #tpu.memory_space<vmem>>, vector<1x8xf32>
    %cst_6 = arith.constant 2.000000e+00 : f32
    %7 = vector.broadcast %cst_6 : f32 to vector<8x8xf32>
    %8 = arith.mulf %7, %5 : vector<8x8xf32>
    %9 = vector.broadcast %6 : vector<1x8xf32> to vector<8x8xf32>
    %10 = arith.subf %9, %8 : vector<8x8xf32>
    %c0_7 = arith.constant 0 : index
    %c0_8 = arith.constant 0 : index
    %11 = vector.load %arg2[%c0_7, %c0_8] : memref<8x1xi32, #tpu.memory_space<vmem>>, vector<8x1xi32>
    %c0_9 = arith.constant 0 : index
    %c0_10 = arith.constant 0 : index
    %12 = vector.load %arg3[%c0_9, %c0_10] : memref<1x8xi32, #tpu.memory_space<vmem>>, vector<1x8xi32>
    %13 = vector.broadcast %11 : vector<8x1xi32> to vector<8x8xi32>
    %14 = vector.broadcast %12 : vector<1x8xi32> to vector<8x8xi32>
    %15 = arith.cmpi eq, %13, %14 : vector<8x8xi32>
    %c8_i32 = arith.constant 8 : i32
    %16 = arith.muli %arg1, %c8_i32 : i32
    %17 = tpu.iota {dimensions = array<i32: 1>} : vector<1x8xi32>
    %18 = vector.broadcast %16 : i32 to vector<1x8xi32>
    %19 = arith.addi %18, %17 : vector<1x8xi32>
    %c8_i32_11 = arith.constant 8 : i32
    %20 = vector.broadcast %c8_i32_11 : i32 to vector<1x8xi32>
    %21 = arith.cmpi slt, %19, %20 : vector<1x8xi32>
    %22 = vector.broadcast %21 : vector<1x8xi1> to vector<8x8xi1>
    %23 = arith.andi %15, %22 : vector<8x8xi1>
    %cst_12 = arith.constant dense<true> : vector<8x8xi1>
    %24 = arith.xori %15, %cst_12 : vector<8x8xi1>
    %25 = vector.broadcast %21 : vector<1x8xi1> to vector<8x8xi1>
    %26 = arith.andi %24, %25 : vector<8x8xi1>
    %c0_13 = arith.constant 0 : index
    %c0_14 = arith.constant 0 : index
    %27 = vector.load %arg9[%c0_13, %c0_14] : memref<8x1xf32, #tpu.memory_space<vmem>>, vector<8x1xf32>
    %cst_15 = arith.constant 0xFF800000 : f32
    %28 = vector.broadcast %cst_15 : f32 to vector<8x8xf32>
    %29 = arith.select %23, %10, %28 : vector<8x8xi1>, vector<8x8xf32>
    %cst_16 = arith.constant dense<0xFF800000> : vector<8xf32>
    %30 = vector.multi_reduction <maximumf>, %29, %cst_16 [1] : vector<8x8xf32> to vector<8xf32>
    %31 = vector.shape_cast %30 : vector<8xf32> to vector<8x1xf32>
    %32 = arith.maximumf %27, %31 : vector<8x1xf32>
    %c0_17 = arith.constant 0 : index
    %c0_18 = arith.constant 0 : index
    %33 = vector.load %arg9[%c0_17, %c0_18] : memref<8x1xf32, #tpu.memory_space<vmem>>, vector<8x1xf32>
    tpu.vector_store %arg9[%c0_17, %c0_18], %32 {strides = array<i32>} : memref<8x1xf32, #tpu.memory_space<vmem>>, vector<8x1xf32>,
    %c0_19 = arith.constant 0 : index
    %c0_20 = arith.constant 0 : index
    %34 = vector.load %arg10[%c0_19, %c0_20] : memref<8x1xf32, #tpu.memory_space<vmem>>, vector<8x1xf32>
    %cst_21 = arith.constant 0x7F800000 : f32
    %35 = vector.broadcast %cst_21 : f32 to vector<8x8xf32>
    %36 = arith.select %26, %10, %35 : vector<8x8xi1>, vector<8x8xf32>
    %cst_22 = arith.constant dense<0x7F800000> : vector<8xf32>
    %37 = vector.multi_reduction <minimumf>, %36, %cst_22 [1] : vector<8x8xf32> to vector<8xf32>
    %38 = vector.shape_cast %37 : vector<8xf32> to vector<8x1xf32>
    %39 = arith.minimumf %34, %38 : vector<8x1xf32>
    %c0_23 = arith.constant 0 : index
    %c0_24 = arith.constant 0 : index
    %40 = vector.load %arg10[%c0_23, %c0_24] : memref<8x1xf32, #tpu.memory_space<vmem>>, vector<8x1xf32>
    tpu.vector_store %arg10[%c0_23, %c0_24], %39 {strides = array<i32>} : memref<8x1xf32, #tpu.memory_space<vmem>>, vector<8x1xf32>,
    %c0_i32_25 = arith.constant 0 : i32
    %41 = arith.cmpi eq, %arg1, %c0_i32_25 : i32
    %42 = arith.extui %41 : i1 to i32
    %c0_i32_26 = arith.constant 0 : i32
    %43 = arith.cmpi ne, %42, %c0_i32_26 : i32
    scf.if %43 {
      %c0_27 = arith.constant 0 : index
      %c0_28 = arith.constant 0 : index
      %44 = vector.load %arg4[%c0_27, %c0_28] : memref<8x1xf32, #tpu.memory_space<vmem>>, vector<8x1xf32>
      %c0_29 = arith.constant 0 : index
      %c0_30 = arith.constant 0 : index
      %45 = vector.load %arg9[%c0_29, %c0_30] : memref<8x1xf32, #tpu.memory_space<vmem>>, vector<8x1xf32>
      %46 = arith.addf %44, %45 : vector<8x1xf32>
      %cst_31 = arith.constant 9.99999996E-13 : f32
      %47 = vector.broadcast %cst_31 : f32 to vector<8x1xf32>
      %48 = arith.maximumf %46, %47 : vector<8x1xf32>
      %49 = math.sqrt %48 : vector<8x1xf32>
      %c0_32 = arith.constant 0 : index
      %c0_33 = arith.constant 0 : index
      %50 = vector.load %arg10[%c0_32, %c0_33] : memref<8x1xf32, #tpu.memory_space<vmem>>, vector<8x1xf32>
      %51 = arith.addf %44, %50 : vector<8x1xf32>
      %cst_34 = arith.constant 9.99999996E-13 : f32
      %52 = vector.broadcast %cst_34 : f32 to vector<8x1xf32>
      %53 = arith.maximumf %51, %52 : vector<8x1xf32>
      %54 = math.sqrt %53 : vector<8x1xf32>
      %55 = arith.subf %49, %54 : vector<8x1xf32>
      %cst_35 = arith.constant 3.000000e-01 : f32
      %56 = vector.broadcast %cst_35 : f32 to vector<8x1xf32>
      %57 = arith.addf %55, %56 : vector<8x1xf32>
      %cst_36 = arith.constant 0.000000e+00 : f32
      %58 = vector.broadcast %cst_36 : f32 to vector<8x1xf32>
      %59 = arith.maximumf %57, %58 : vector<8x1xf32>
      %c8_i32_37 = arith.constant 8 : i32
      %60 = arith.muli %arg0, %c8_i32_37 : i32
      %61 = tpu.iota {dimensions = array<i32: 0>} : vector<8x1xi32>
      %62 = vector.broadcast %60 : i32 to vector<8x1xi32>
      %63 = arith.addi %62, %61 : vector<8x1xi32>
      %c8_i32_38 = arith.constant 8 : i32
      %64 = vector.broadcast %c8_i32_38 : i32 to vector<8x1xi32>
      %65 = arith.cmpi slt, %63, %64 : vector<8x1xi32>
      %cst_39 = arith.constant 0.000000e+00 : f32
      %66 = vector.broadcast %cst_39 : f32 to vector<8x1xf32>
      %67 = arith.select %65, %59, %66 : vector<8x1xi1>, vector<8x1xf32>
      %68 = tpu.transpose %67, [1, 0] : vector<8x1xf32> -> vector<1x8xf32>
      %69 = vector.shape_cast %68 : vector<1x8xf32> to vector<1x1x8xf32>
      %c0_40 = arith.constant 0 : index
      %c0_41 = arith.constant 0 : index
      %c0_42 = arith.constant 0 : index
      %70 = vector.load %arg8[%c0_40, %c0_41, %c0_42] : memref<1x1x8xf32, #tpu.memory_space<vmem>>, vector<1x1x8xf32>
      tpu.vector_store %arg8[%c0_40, %c0_41, %c0_42], %69 {strides = array<i32>} : memref<1x1x8xf32, #tpu.memory_space<vmem>>, vector<1x1x8xf32>,
    } else {
    }
    return
  }
  func.func @transform_0(%arg0: i32, %arg1: i32) -> (i32, i32) {
    %c0_i32 = arith.constant 0 : i32
    %c0_i32_0 = arith.constant 0 : i32
    return %arg0, %c0_i32 : i32, i32
  }
  func.func @transform_1(%arg0: i32, %arg1: i32) -> (i32, i32) {
    %c0_i32 = arith.constant 0 : i32
    %c0_i32_0 = arith.constant 0 : i32
    return %c0_i32, %arg1 : i32, i32
  }
  func.func @transform_2(%arg0: i32, %arg1: i32) -> (i32, i32) {
    %c0_i32 = arith.constant 0 : i32
    %c0_i32_0 = arith.constant 0 : i32
    return %arg0, %c0_i32 : i32, i32
  }
  func.func @transform_3(%arg0: i32, %arg1: i32) -> (i32, i32) {
    %c0_i32 = arith.constant 0 : i32
    %c0_i32_0 = arith.constant 0 : i32
    return %c0_i32, %arg1 : i32, i32
  }
  func.func @transform_4(%arg0: i32, %arg1: i32) -> (i32, i32) {
    %c0_i32 = arith.constant 0 : i32
    %c0_i32_0 = arith.constant 0 : i32
    return %arg0, %c0_i32 : i32, i32
  }
  func.func @transform_5(%arg0: i32, %arg1: i32) -> (i32, i32) {
    %c0_i32 = arith.constant 0 : i32
    %c0_i32_0 = arith.constant 0 : i32
    return %arg1, %c0_i32 : i32, i32
  }
  func.func @transform_6(%arg0: i32, %arg1: i32) -> (i32, i32, i32) {
    %c0_i32 = arith.constant 0 : i32
    %c0_i32_0 = arith.constant 0 : i32
    %c0_i32_1 = arith.constant 0 : i32
    return %arg0, %c0_i32, %c0_i32_0 : i32, i32, i32
  }
}

</mosaic_0001>

<llo_original>
// kernel: tpu_custom_call.1
$region0: #{tpu_custom_call.1}
  #allocation0 [shape = 'u32[]', space=smem, size = 0x4, offset = 0x4, fixed_abs, tag = 'smem constant byte address 0x4 - core index']
  #allocation1 [shape = 'u32[144,128]{1,0:T(1,128)}', space=vmem, size = 0x12000, scoped, tag = 'internal scratch']
  #allocation2 [shape = 'f32[8,1]{1,0:T(8,128)}', space=vmem, size = 0x1000, scoped, tag = 'scratch operand']
  #allocation3 [shape = 'f32[8,1]{1,0:T(8,128)}', space=vmem, size = 0x1000, scoped, tag = 'scratch operand']
  %s0 = inlined_call_operand.vmem [shape: s32[8,1], index: 0, kind: input, shape index: {}]
  %s1 = inlined_call_operand.vmem [shape: s32[1,8], index: 1, kind: input, shape index: {}]
  %s2 = inlined_call_operand.vmem [shape: f32[8,1], index: 2, kind: input, shape index: {}]
  %s3 = inlined_call_operand.vmem [shape: f32[1,8], index: 3, kind: input, shape index: {}]
  %s4 = inlined_call_operand.vmem [shape: f32[8,128], index: 4, kind: input, shape index: {}]
  %s5 = inlined_call_operand.vmem [shape: f32[8,128], index: 5, kind: input, shape index: {}]
  %s6 = inlined_call_operand.hbm [shape: f32[1,1,8], index: 6, kind: output, shape index: {}]
  %s7 = sld [smem:[#allocation0]]
  $region42: #{tpu_custom_call.1} parent=0
    _
  %s9 = ssub.s32 1, %s7
  %s10 = scalar_select 0, %s9, %s7
  $region1: #{tpu_custom_call.1} parent=0
    #allocation4 [shape = 'u8[512]{0}', space=vmem, size = 0x400, scoped, tag = 'output window, operand 0, single buffered']
    #allocation5 [shape = 's32[1]{0}', space=sflag, size = 0x4, scoped, tag = 'scoped memory for tpu_custom_call.1']
    %11 = vsyncpa [#allocation5], 0
    // Predicated region
    $region2: #{tpu_custom_call.1} parent=1 // pred_check
      _
    $region3: #{tpu_custom_call.1} parent=1 // pred_check_branch
      %13 = sbr.rel (0) target = $region5
    $region4: #{tpu_custom_call.1} parent=1 // pred_region
      _
    $region5: #{tpu_custom_call.1} parent=1 // pred_fallthru
      _
    // Predicated region
    $region6: #{tpu_custom_call.1} parent=1 // pred_check
      _
    $region7: #{tpu_custom_call.1} parent=1 // pred_check_branch
      %15 = sbr.rel (0) target = $region9
    $region8: #{tpu_custom_call.1} parent=1 // pred_region
      _
    $region9: #{tpu_custom_call.1} parent=1 // pred_fallthru
      _
    // Predicated region
    $region10: #{tpu_custom_call.1} parent=1 // pred_check
      _
    $region11: #{tpu_custom_call.1} parent=1 // pred_check_branch
      %17 = sbr.rel (0) target = $region13
    $region12: #{tpu_custom_call.1} parent=1 // pred_region
      _
    $region13: #{tpu_custom_call.1} parent=1 // pred_fallthru
      _
    // Predicated region
    $region14: #{tpu_custom_call.1} parent=1 // pred_check
      _
    $region15: #{tpu_custom_call.1} parent=1 // pred_check_branch
      %19 = sbr.rel (0) target = $region17
    $region16: #{tpu_custom_call.1} parent=1 // pred_region
      _
    $region17: #{tpu_custom_call.1} parent=1 // pred_fallthru
      _
    // Predicated region
    $region18: #{tpu_custom_call.1} parent=1 // pred_check
      _
    $region19: #{tpu_custom_call.1} parent=1 // pred_check_branch
      %21 = sbr.rel (0) target = $region21
    $region20: #{tpu_custom_call.1} parent=1 // pred_region
      _
    $region21: #{tpu_custom_call.1} parent=1 // pred_fallthru
      _
    // Predicated region
    $region22: #{tpu_custom_call.1} parent=1 // pred_check
      _
    $region23: #{tpu_custom_call.1} parent=1 // pred_check_branch
      %23 = sbr.rel (0) target = $region25
    $region24: #{tpu_custom_call.1} parent=1 // pred_region
      _
    $region25: #{tpu_custom_call.1} parent=1 // pred_fallthru
      _
    %p24 = scmp.eq.s32.totalorder 0, 0
    // Predicated region
    $region26: #{tpu_custom_call.1} parent=1 // pred_check
      %p25 = pneg %p24
    $region27: #{tpu_custom_call.1} parent=1 // pred_check_branch
      %27 = sbr.rel (%p25) target = $region29
    $region28: #{tpu_custom_call.1} parent=1 // pred_region
      %vm28 = vcmask 7168
      %29 = vst.msk [vmem:[#allocation2] sm:$0xff] %vm28, -inf
      %30 = vst.msk [vmem:[#allocation3] sm:$0xff] %vm28, inf
    $region29: #{tpu_custom_call.1} parent=1 // pred_fallthru
      _
    %v31 = vld [vmem:[%s4] sm:$0xff]
    %v32 = vld [vmem:[%s5] sm:$0xff]
    %33 = vmatprep.subr.mxu0 0.0
    %34 = vmatpush1.xpose.msra.mxu0 %v32
    %35 = vmatprep.subr.mxu0 0.0
    %36 = vmatpush1.xpose.msra.mxu0 0.0
    %37 = vmatprep.subr.mxu0 0.0
    %38 = vmatpush1.xpose.msra.mxu0 0.0
    %39 = vmatprep.subr.mxu0 0.0
    %40 = vmatpush1.xpose.msra.mxu0 0.0
    %41 = vmatprep.subr.mxu0 0.0
    %42 = vmatpush1.xpose.msra.mxu0 0.0
    %43 = vmatprep.subr.mxu0 0.0
    %44 = vmatpush1.xpose.msra.mxu0 0.0
    %45 = vmatprep.subr.mxu0 0.0
    %46 = vmatpush1.xpose.msra.mxu0 0.0
    %47 = vmatprep.subr.mxu0 0.0
    %48 = vmatpush1.xpose.msra.mxu0 0.0
    %49 = vmatprep.subr.mxu0 0.0
    %50 = vmatpush1.xpose.msra.mxu0 0.0
    %51 = vmatprep.subr.mxu0 0.0
    %52 = vmatpush1.xpose.msra.mxu0 0.0
    %53 = vmatprep.subr.mxu0 0.0
    %54 = vmatpush1.xpose.msra.mxu0 0.0
    %55 = vmatprep.subr.mxu0 0.0
    %56 = vmatpush1.xpose.msra.mxu0 0.0
    %57 = vmatprep.subr.mxu0 0.0
    %58 = vmatpush1.xpose.msra.mxu0 0.0
    %59 = vmatprep.subr.mxu0 0.0
    %60 = vmatpush1.xpose.msra.mxu0 0.0
    %61 = vmatprep.subr.mxu0 0.0
    %62 = vmatpush1.xpose.msra.mxu0 0.0
    %63 = vmatprep.subr.mxu0 0.0
    %64 = vmatpush1.xpose.msra.mxu0 0.0
    %65 = vmatprep.subr.mxu0 0.0
    %66 = vmatpush1.xpose.msra.mxu0 0.0
    %67 = vmatprep.subr.mxu0 0.0
    %68 = vmatpush1.xpose.msra.mxu0 0.0
    %69 = vmatprep.subr.mxu0 0.0
    %70 = vmatpush1.xpose.msra.mxu0 0.0
    %71 = vmatprep.subr.mxu0 0.0
    %72 = vmatpush1.xpose.msra.mxu0 0.0
    %73 = vmatprep.subr.mxu0 0.0
    %74 = vmatpush1.xpose.msra.mxu0 0.0
    %75 = vmatprep.subr.mxu0 0.0
    %76 = vmatpush1.xpose.msra.mxu0 0.0
    %77 = vmatprep.subr.mxu0 0.0
    %78 = vmatpush1.xpose.msra.mxu0 0.0
    %79 = vmatprep.subr.mxu0 0.0
    %80 = vmatpush1.xpose.msra.mxu0 0.0
    %81 = vmatprep.subr.mxu0 0.0
    %82 = vmatpush1.xpose.msra.mxu0 0.0
    %83 = vmatprep.subr.mxu0 0.0
    %84 = vmatpush1.xpose.msra.mxu0 0.0
    %85 = vmatprep.subr.mxu0 0.0
    %86 = vmatpush1.xpose.msra.mxu0 0.0
    %87 = vmatprep.subr.mxu0 0.0
    %88 = vmatpush1.xpose.msra.mxu0 0.0
    %89 = vmatprep.subr.mxu0 0.0
    %90 = vmatpush1.xpose.msra.mxu0 0.0
    %91 = vmatprep.subr.mxu0 0.0
    %92 = vmatpush1.xpose.msra.mxu0 0.0
    %93 = vmatprep.subr.mxu0 0.0
    %94 = vmatpush1.xpose.msra.mxu0 0.0
    %95 = vmatprep.subr.mxu0 0.0
    %96 = vmatpush1.xpose.msra.mxu0 0.0
    %97 = vmatprep.mubr.f32.mxu0 0.0
    %98 = vmatmul.mubr.f32.gmra.mrb[0].mxu0 %v31
    %v99 = vpop.f32.mrb[0].mxu0
    %v100 = vadd.f32 0.0, %v99
    %v101 = vpop.f32.mrb[0].mxu0
    %102 = vdwg.mxu0
    %v103 = vld [vmem:[%s3] sm:$0x1]
    %v104 = vmul.f32 %v100, 2.0
    %v106 = vlaneseq
    %v107 = vshrl.u32 %v106, 7
    %v108 = vsub.s32 0, %v107
    %v109 = vrot.slane %v103, %v108
    %v111 = vsub.f32 %v109, %v104
    %v112 = vld [vmem:[%s0] sm:$0xff]
    %v113 = vld [vmem:[%s1] sm:$0x1]
    %114 = vset.pattern.permute.xlu0 0
    %115 = vperm.xlu0 %114, %v112
    %v116 = vpop.permute.xlu0 %115
    %v117 = vlaneseq
    %v118 = vshrl.u32 %v117, 7
    %v119 = vsub.s32 0, %v118
    %v120 = vrot.slane %v113, %v119
    %vm121 = vcmp.eq.s32.totalorder %v116, %v120
    %s122 = smul.u32 0, 8
    %v123 = vlaneseq
    %v124 = vand.u32 %v123, 127
    %v125 = vstv %s122
    %v126 = vadd.s32 %v125, %v124
    %vm127 = vcmp.lt.s32.totalorder %v126, 8
    %v128 = vsel %vm127, 1, 0
    %vm129 = vcmp.eq.s32.totalorder %v128, 1
    %vm130 = vmand %vm121, %vm129
    %vm131 = vmxor %vm121, 1
    %vm132 = vmand %vm131, %vm129
    %v133 = vld [vmem:[#allocation2] sm:$0xff]
    %v134 = vsel %vm130, %v111, -inf
    %vm135 = vcmask 64512
    %v136 = vsel %vm135, %v134, -inf
    %137 = vmax.xlane.f32.xlu0 %v136
    %v138 = vpop.xlane.xlu0 %137
    %v139 = vmax.f32 %v133, %v138
    %vm140 = vcmask 7168
    %141 = vst.msk [vmem:[#allocation2] sm:$0xff] %vm140, %v139
    %v142 = vld [vmem:[#allocation3] sm:$0xff]
    %v143 = vsel %vm132, %v111, inf
    %v144 = vsel %vm135, %v143, inf
    %145 = vmin.xlane.f32.xlu0 %v144
    %v146 = vpop.xlane.xlu0 %145
    %v147 = vmin.f32 %v142, %v146
    %148 = vst.msk [vmem:[#allocation3] sm:$0xff] %vm140, %v147
    // Predicated region
    $region30: #{tpu_custom_call.1} parent=1 // pred_check
      %p149 = pneg %p24
    $region31: #{tpu_custom_call.1} parent=1 // pred_check_branch
      %151 = sbr.rel (%p149) target = $region33
    $region32: #{tpu_custom_call.1} parent=1 // pred_region
      %v152 = vld [vmem:[%s2] sm:$0xff]
      %v153 = vld [vmem:[#allocation2] sm:$0xff]
      %v154 = vadd.f32 %v152, %v153
      %v155 = vmax.f32 %v154, 1e-12
      %v156 = vrsqrt.pop %v155
      %v157 = vmul.f32 %v155, %v156
      %vm158 = vcmp.eq.f32.partialorder %v155, inf
      %v159 = vsel %vm158, %v155, %v157
      %vm160 = vcmp.eq.f32.partialorder %v155, 0.0
      %v161 = vand.u32 %v155, 2147483648
      %v162 = vsel %vm160, %v161, %v159
      %v163 = vld [vmem:[#allocation3] sm:$0xff]
      %v164 = vadd.f32 %v152, %v163
      %v165 = vmax.f32 %v164, 1e-12
      %v166 = vrsqrt.pop %v165
      %v167 = vmul.f32 %v165, %v166
      %vm168 = vcmp.eq.f32.partialorder %v165, inf
      %v169 = vsel %vm168, %v165, %v167
      %vm170 = vcmp.eq.f32.partialorder %v165, 0.0
      %v171 = vand.u32 %v165, 2147483648
      %v172 = vsel %vm170, %v171, %v169
      %v173 = vsub.f32 %v162, %v172
      %v174 = vadd.f32 %v173, 0.3
      %v175 = vmax.f32 %v174, 0.0
      %s176 = smul.u32 0, 8
      %v177 = vlaneseq
      %v178 = vshrl.u32 %v177, 7
      %v179 = vstv %s176
      %v180 = vadd.s32 %v179, %v178
      %vm181 = vcmp.lt.s32.totalorder %v180, 8
      %v182 = vsel %vm181, %v175, 0.0
      %183 = vxpose.xlu0.b32.start [1/16] %v182, 128
      %184 = vxpose.xlu0.b32.cont [2/16] 0.0, 128
      %185 = vxpose.xlu0.b32.cont [3/16] 0.0, 128
      %186 = vxpose.xlu0.b32.cont [4/16] 0.0, 128
      %187 = vxpose.xlu0.b32.cont [5/16] 0.0, 128
      %188 = vxpose.xlu0.b32.cont [6/16] 0.0, 128
      %189 = vxpose.xlu0.b32.cont [7/16] 0.0, 128
      %190 = vxpose.xlu0.b32.cont [8/16] 0.0, 128
      %191 = vxpose.xlu0.b32.cont [9/16] 0.0, 128
      %192 = vxpose.xlu0.b32.cont [10/16] 0.0, 128
      %193 = vxpose.xlu0.b32.cont [11/16] 0.0, 128
      %194 = vxpose.xlu0.b32.cont [12/16] 0.0, 128
      %195 = vxpose.xlu0.b32.cont [13/16] 0.0, 128
      %196 = vxpose.xlu0.b32.cont [14/16] 0.0, 128
      %197 = vxpose.xlu0.b32.cont [15/16] 0.0, 128
      %198 = vxpose.xlu0.b32.end [16/16] 0.0, 128
      %v199 = vpop.trf.xlu0
      %v200 = vpop.trf.xlu0
      %v201 = vpop.trf.xlu0
      %v202 = vpop.trf.xlu0
      %v203 = vpop.trf.xlu0
      %v204 = vpop.trf.xlu0
      %v205 = vpop.trf.xlu0
      %v206 = vpop.trf.xlu0
      %v207 = vpop.trf.xlu0
      %v208 = vpop.trf.xlu0
      %v209 = vpop.trf.xlu0
      %v210 = vpop.trf.xlu0
      %v211 = vpop.trf.xlu0
      %v212 = vpop.trf.xlu0
      %v213 = vpop.trf.xlu0
      %v214 = vpop.trf.xlu0
      %vm215 = vcmask 57344
      %216 = vst.msk [vmem:[#allocation4] sm:$0x1] %vm215, %v199
    $region33: #{tpu_custom_call.1} parent=1 // pred_fallthru
      _
    // Predicated region
    $region34: #{tpu_custom_call.1} parent=1 // pred_check
      _
    $region35: #{tpu_custom_call.1} parent=1 // pred_check_branch
      %218 = sbr.rel (0) target = $region37
    $region36: #{tpu_custom_call.1} parent=1 // pred_region
      %s220 = ssub.s32 16, 16
      %221 = vsyncadd [#allocation5], %s220
      %s223 = sshll.u32 [#allocation4], 4
      %s224 = int_to_ptr.vmem [resolvable:$true] %s223
      %226 = dma.vmem_to_hbm [thread:$0]  %s224, 16, %s6, [#allocation5]
    $region37: #{tpu_custom_call.1} parent=1 // pred_fallthru
      _
    // Predicated region
    $region38: #{tpu_custom_call.1} parent=1 // pred_check
      _
    $region39: #{tpu_custom_call.1} parent=1 // pred_check_branch
      %228 = sbr.rel (0) target = $region41
    $region40: #{tpu_custom_call.1} parent=1 // pred_region
      %229 = dma.done [#allocation5], 16
    $region41: #{tpu_custom_call.1} parent=1 // pred_fallthru
      _
    %230 = vsyncpa [#allocation5], 1

</llo_original>
